<compile_context>
chip_gen: v6e
topology: v6e:2x2x1
jax: 0.10.0
libtpu: 0.0.40
codegen_flags: <defaults>
</compile_context>

<pallas_src>
import functools

import jax
import jax.numpy as jnp
from jax.experimental import pallas as pl
from jax.experimental.pallas import tpu as pltpu

LANE = 128
SUBLANE_BF16 = 16  # bf16 packs 16 rows per vreg sublane group


def _round_up(x, m):
    return ((x + m - 1) // m) * m


def mlp_kernel(x_ref, w1_ref, b1_ref, w2_ref, b2_ref, w3_ref, b3_ref, o_ref):
    # Layer 1: (TB, s) bf16 @ (s, 256) bf16 -> f32 acc -> +b1 -> relu
    h1 = jnp.dot(x_ref[...], w1_ref[...], preferred_element_type=jnp.float32) + b1_ref[...]
    h1 = jnp.maximum(h1, 0.0).astype(jnp.bfloat16)
    # Layer 2: (TB, 256) @ (256, 512)
    h2 = jnp.dot(h1, w2_ref[...], preferred_element_type=jnp.float32) + b2_ref[...]
    h2 = jnp.maximum(h2, 0.0).astype(jnp.bfloat16)
    # Layer 3: (TB, 512) @ (512, s_pad)  (padded cols of w3/b3 are zero)
    h3 = jnp.dot(h2, w3_ref[...], preferred_element_type=jnp.float32) + b3_ref[...]
    o_ref[...] = jnp.maximum(h3, 0.0).astype(o_ref.dtype)


def prepare_params(params, s):
    """Cast weights to bf16; pad only the OUTPUT feature dim to 128 lanes.

    Padded w3 columns / b3 lanes are zero, so padded output lanes are relu(0)=0
    and are sliced off in the wrapper.  Done once, outside the hot path."""
    w1, b1, w2, b2, w3, b3 = params
    s_pad = _round_up(s, LANE)
    w1_p = w1.astype(jnp.bfloat16)                                   # (s, 256) unpadded
    w2_p = w2.astype(jnp.bfloat16)                                   # (256, 512)
    w3_p = jnp.zeros((512, s_pad), jnp.bfloat16).at[:, :s].set(w3.astype(jnp.bfloat16))
    b3_p = jnp.zeros((1, s_pad), jnp.float32).at[:, :s].set(b3)
    return (w1_p, b1, w2_p, b2, w3_p, b3_p)


def _choose_tile(B, tb):
    """Pick a 16-row-aligned batch tile.

    Targets >=2 grid tiles when the batch is big enough (so v7x's second
    TensorCore gets work via the "parallel" axis) while capping at tb."""
    tb = max(SUBLANE_BF16, (tb // SUBLANE_BF16) * SUBLANE_BF16)
    half = _round_up(max(1, -(-B // 2)), SUBLANE_BF16)
    tb_eff = min(tb, half)
    B_pad = _round_up(B, tb_eff)
    return tb_eff, B_pad


@functools.partial(jax.jit, static_argnames=("s", "tb"))
def net_forward(x, prepped, *, s, tb=512):
    """Fused forward pass. x: (B, s) float32 -> (B, s) float32."""
    w1_p, b1, w2_p, b2, w3_p, b3_p = prepped
    B = x.shape[0]
    s_pad = w3_p.shape[1]

    tb_eff, B_pad = _choose_tile(B, tb)
    num_tiles = B_pad // tb_eff

    # bf16 x, padded only in the batch dim (feature dim stays at s).
    x_bf16 = x.astype(jnp.bfloat16)
    if B_pad == B:
        x_p = x_bf16
    else:
        x_p = jnp.zeros((B_pad, s), jnp.bfloat16).at[:B, :].set(x_bf16)

    const = lambda shape: pl.BlockSpec(shape, lambda i: (0, 0))
    out_pad = pl.pallas_call(
        mlp_kernel,
        out_shape=jax.ShapeDtypeStruct((B_pad, s_pad), jnp.float32),
        grid_spec=pl.GridSpec(
            grid=(num_tiles,),
            in_specs=[
                pl.BlockSpec((tb_eff, s), lambda i: (i, 0)),   # x: streamed, unpadded K
                const(w1_p.shape), const(b1.shape),            # weights: VMEM-resident
                const(w2_p.shape), const(b2.shape),
                const(w3_p.shape), const(b3_p.shape),
            ],
            out_specs=pl.BlockSpec((tb_eff, s_pad), lambda i: (i, 0)),  # lane-dense store
        ),
        compiler_params=pltpu.CompilerParams(
            dimension_semantics=("parallel",)),
    )(x_p, w1_p, b1, w2_p, b2, w3_p, b3_p)

    # Padded lanes are exactly zero; padded batch rows are garbage-but-unused.
    # (A consumer that can fuse could take out_pad directly to avoid this slice.)
    return out_pad[:B, :s]


def init_params(key, s):
    """Deterministic init mirroring nn.Linear default U(-1/sqrt(fan_in), +1/sqrt(fan_in)).

    Weights stored as (in, out); biases as (1, out)."""
    dims = [(s, 256), (256, 512), (512, s)]
    params = []
    for fan_in, fan_out in dims:
        key, kw, kb = jax.random.split(key, 3)
        bound = 1.0 / jnp.sqrt(fan_in)
        w = jax.random.uniform(kw, (fan_in, fan_out), jnp.float32, -bound, bound)
        b = jax.random.uniform(kb, (1, fan_out), jnp.float32, -bound, bound)
        params += [w, b]
    return tuple(params)


def reference_forward_f32(x, params):
    w1, b1, w2, b2, w3, b3 = params
    h = jax.nn.relu(x @ w1 + b1)
    h = jax.nn.relu(h @ w2 + b2)
    return jax.nn.relu(h @ w3 + b3)


def reference_forward_bf16(x, params):
    """Mimics the kernel's numerics: bf16 operands, f32 accumulation / bias / relu."""
    w1, b1, w2, b2, w3, b3 = params
    bf = jnp.bfloat16
    h = jax.nn.relu(jnp.dot(x.astype(bf), w1.astype(bf),
                            preferred_element_type=jnp.float32) + b1)
    h = jax.nn.relu(jnp.dot(h.astype(bf), w2.astype(bf),
                            preferred_element_type=jnp.float32) + b2)
    return jax.nn.relu(jnp.dot(h.astype(bf), w3.astype(bf),
                               preferred_element_type=jnp.float32) + b3)


if __name__ == "__main__":
    s = 32       # input/output feature size of Net(s)
    B = 8        # batch
    key = jax.random.PRNGKey(0)
    key, kx = jax.random.split(key)
    x = jax.random.normal(kx, (B, s), jnp.float32)
    params = init_params(key, s)
    prepped = prepare_params(params, s)

    out = net_forward(x, prepped, s=s)
    out = jax.block_until_ready(out)
    assert out.shape == (B, s)

    # Tight check against a reference with identical bf16/f32 numerics.
    ref_bf16 = reference_forward_bf16(x, params)
    assert jnp.allclose(out, ref_bf16, atol=1e-3, rtol=1e-3), \
        "mismatch vs bf16-numerics JAX reference"

    # Loose sanity check against the pure-f32 reference (bf16 weight rounding).
    ref_f32 = reference_forward_f32(x, params)
    assert jnp.allclose(out, ref_f32, atol=5e-2, rtol=5e-2), \
        "mismatch vs f32 JAX reference"

    # Exercise a multi-tile grid (ensures the batch-tiled "parallel" path works).
    B2 = 300
    key, kx2 = jax.random.split(key)
    x2 = jax.random.normal(kx2, (B2, s), jnp.float32)
    out2 = jax.block_until_ready(net_forward(x2, prepped, s=s))
    ref2 = reference_forward_bf16(x2, params)
    assert out2.shape == (B2, s)
    assert jnp.allclose(out2, ref2, atol=1e-3, rtol=1e-3), \
        "mismatch vs bf16-numerics JAX reference (multi-tile)"

    print("KERNEL_OK")
</pallas_src>

<mosaic_0001>
module attributes {stable_mosaic.version = 11 : i64} {
  func.func @mlp_kernel(%arg0: i32, %arg1: memref<16x32xbf16, #tpu.memory_space<vmem>>, %arg2: memref<32x256xbf16, #tpu.memory_space<vmem>>, %arg3: memref<1x256xf32, #tpu.memory_space<vmem>>, %arg4: memref<256x512xbf16, #tpu.memory_space<vmem>>, %arg5: memref<1x512xf32, #tpu.memory_space<vmem>>, %arg6: memref<512x128xbf16, #tpu.memory_space<vmem>>, %arg7: memref<1x128xf32, #tpu.memory_space<vmem>>, %arg8: memref<16x128xf32, #tpu.memory_space<vmem>>) attributes {dimension_semantics = [#tpu.dimension_semantics<parallel>], iteration_bounds = array<i64: 1>, scalar_prefetch = 0 : i64, scratch_operands = 0 : i64, tpu.core_type = #tpu.core_type<tc>, window_params = [{transform_indices = @transform_0, window_bounds = array<i64: 16, 32>}, {pipeline_mode = #tpu.pipeline_mode<synchronous>, transform_indices = @transform_1, window_bounds = array<i64: 32, 256>}, {pipeline_mode = #tpu.pipeline_mode<synchronous>, transform_indices = @transform_2, window_bounds = array<i64: 1, 256>}, {pipeline_mode = #tpu.pipeline_mode<synchronous>, transform_indices = @transform_3, window_bounds = array<i64: 256, 512>}, {pipeline_mode = #tpu.pipeline_mode<synchronous>, transform_indices = @transform_4, window_bounds = array<i64: 1, 512>}, {pipeline_mode = #tpu.pipeline_mode<synchronous>, transform_indices = @transform_5, window_bounds = array<i64: 512, 128>}, {pipeline_mode = #tpu.pipeline_mode<synchronous>, transform_indices = @transform_6, window_bounds = array<i64: 1, 128>}, {transform_indices = @transform_7, window_bounds = array<i64: 16, 128>}]} {
    %c0 = arith.constant 0 : index
    %c0_0 = arith.constant 0 : index
    %0 = vector.load %arg1[%c0, %c0_0] : memref<16x32xbf16, #tpu.memory_space<vmem>>, vector<16x32xbf16>
    %c0_1 = arith.constant 0 : index
    %c0_2 = arith.constant 0 : index
    %1 = vector.load %arg2[%c0_1, %c0_2] : memref<32x256xbf16, #tpu.memory_space<vmem>>, vector<32x256xbf16>
    %cst = arith.constant dense<0.000000e+00> : vector<16x256xf32>
    %2 = tpu.matmul %0, %1, %cst {dimension_numbers = #tpu.dot_dimension_numbers<[1], [0], [0], [1], [0, 0, 1, 1], [], []>} : vector<16x32xbf16>, vector<32x256xbf16>, vector<16x256xf32> -> vector<16x256xf32>
    %c0_3 = arith.constant 0 : index
    %c0_4 = arith.constant 0 : index
    %3 = vector.load %arg3[%c0_3, %c0_4] : memref<1x256xf32, #tpu.memory_space<vmem>>, vector<1x256xf32>
    %4 = vector.broadcast %3 : vector<1x256xf32> to vector<16x256xf32>
    %5 = arith.addf %2, %4 : vector<16x256xf32>
    %cst_5 = arith.constant 0.000000e+00 : f32
    %6 = vector.broadcast %cst_5 : f32 to vector<16x256xf32>
    %7 = arith.maximumf %5, %6 : vector<16x256xf32>
    %8 = arith.truncf %7 : vector<16x256xf32> to vector<16x256xbf16>
    %c0_6 = arith.constant 0 : index
    %c0_7 = arith.constant 0 : index
    %9 = vector.load %arg4[%c0_6, %c0_7] : memref<256x512xbf16, #tpu.memory_space<vmem>>, vector<256x512xbf16>
    %cst_8 = arith.constant dense<0.000000e+00> : vector<16x512xf32>
    %10 = tpu.matmul %8, %9, %cst_8 {dimension_numbers = #tpu.dot_dimension_numbers<[1], [0], [0], [1], [0, 0, 1, 1], [], []>} : vector<16x256xbf16>, vector<256x512xbf16>, vector<16x512xf32> -> vector<16x512xf32>
    %c0_9 = arith.constant 0 : index
    %c0_10 = arith.constant 0 : index
    %11 = vector.load %arg5[%c0_9, %c0_10] : memref<1x512xf32, #tpu.memory_space<vmem>>, vector<1x512xf32>
    %12 = vector.broadcast %11 : vector<1x512xf32> to vector<16x512xf32>
    %13 = arith.addf %10, %12 : vector<16x512xf32>
    %cst_11 = arith.constant 0.000000e+00 : f32
    %14 = vector.broadcast %cst_11 : f32 to vector<16x512xf32>
    %15 = arith.maximumf %13, %14 : vector<16x512xf32>
    %16 = arith.truncf %15 : vector<16x512xf32> to vector<16x512xbf16>
    %c0_12 = arith.constant 0 : index
    %c0_13 = arith.constant 0 : index
    %17 = vector.load %arg6[%c0_12, %c0_13] : memref<512x128xbf16, #tpu.memory_space<vmem>>, vector<512x128xbf16>
    %cst_14 = arith.constant dense<0.000000e+00> : vector<16x128xf32>
    %18 = tpu.matmul %16, %17, %cst_14 {dimension_numbers = #tpu.dot_dimension_numbers<[1], [0], [0], [1], [0, 0, 1, 1], [], []>} : vector<16x512xbf16>, vector<512x128xbf16>, vector<16x128xf32> -> vector<16x128xf32>
    %c0_15 = arith.constant 0 : index
    %c0_16 = arith.constant 0 : index
    %19 = vector.load %arg7[%c0_15, %c0_16] : memref<1x128xf32, #tpu.memory_space<vmem>>, vector<1x128xf32>
    %20 = vector.broadcast %19 : vector<1x128xf32> to vector<16x128xf32>
    %21 = arith.addf %18, %20 : vector<16x128xf32>
    %cst_17 = arith.constant 0.000000e+00 : f32
    %22 = vector.broadcast %cst_17 : f32 to vector<16x128xf32>
    %23 = arith.maximumf %21, %22 : vector<16x128xf32>
    %c0_18 = arith.constant 0 : index
    %c0_19 = arith.constant 0 : index
    %24 = vector.load %arg8[%c0_18, %c0_19] : memref<16x128xf32, #tpu.memory_space<vmem>>, vector<16x128xf32>
    tpu.vector_store %arg8[%c0_18, %c0_19], %23 {strides = array<i32>} : memref<16x128xf32, #tpu.memory_space<vmem>>, vector<16x128xf32>,
    return
  }
  func.func @transform_0(%arg0: i32) -> (i32, i32) {
    %c0_i32 = arith.constant 0 : i32
    %c0_i32_0 = arith.constant 0 : i32
    return %arg0, %c0_i32 : i32, i32
  }
  func.func @transform_1(%arg0: i32) -> (i32, i32) {
    %c0_i32 = arith.constant 0 : i32
    %c0_i32_0 = arith.constant 0 : i32
    %c0_i32_1 = arith.constant 0 : i32
    return %c0_i32, %c0_i32_0 : i32, i32
  }
  func.func @transform_2(%arg0: i32) -> (i32, i32) {
    %c0_i32 = arith.constant 0 : i32
    %c0_i32_0 = arith.constant 0 : i32
    %c0_i32_1 = arith.constant 0 : i32
    return %c0_i32, %c0_i32_0 : i32, i32
  }
  func.func @transform_3(%arg0: i32) -> (i32, i32) {
    %c0_i32 = arith.constant 0 : i32
    %c0_i32_0 = arith.constant 0 : i32
    %c0_i32_1 = arith.constant 0 : i32
    return %c0_i32, %c0_i32_0 : i32, i32
  }
  func.func @transform_4(%arg0: i32) -> (i32, i32) {
    %c0_i32 = arith.constant 0 : i32
    %c0_i32_0 = arith.constant 0 : i32
    %c0_i32_1 = arith.constant 0 : i32
    return %c0_i32, %c0_i32_0 : i32, i32
  }
  func.func @transform_5(%arg0: i32) -> (i32, i32) {
    %c0_i32 = arith.constant 0 : i32
    %c0_i32_0 = arith.constant 0 : i32
    %c0_i32_1 = arith.constant 0 : i32
    return %c0_i32, %c0_i32_0 : i32, i32
  }
  func.func @transform_6(%arg0: i32) -> (i32, i32) {
    %c0_i32 = arith.constant 0 : i32
    %c0_i32_0 = arith.constant 0 : i32
    %c0_i32_1 = arith.constant 0 : i32
    return %c0_i32, %c0_i32_0 : i32, i32
  }
  func.func @transform_7(%arg0: i32) -> (i32, i32) {
    %c0_i32 = arith.constant 0 : i32
    %c0_i32_0 = arith.constant 0 : i32
    return %arg0, %c0_i32 : i32, i32
  }
}

</mosaic_0001>

<llo_original>
// kernel: net_forward.1
$region0: #{net_forward.1}
  #allocation0 [shape = 'u32[]', space=smem, size = 0x4, offset = 0x4, fixed_abs, tag = 'smem constant byte address 0x4 - core index']
  #allocation1 [shape = 'u32[144,128]{1,0:T(1,128)}', space=vmem, size = 0x12000, scoped, tag = 'internal scratch']
  %s0 = inlined_call_operand.vmem [shape: bf16[16,32], index: 0, kind: input, shape index: {}]
  %s1 = inlined_call_operand.hbm [shape: bf16[32,256], index: 1, kind: input, shape index: {}]
  %s2 = inlined_call_operand.vmem [shape: f32[1,256], index: 2, kind: input, shape index: {}]
  %s3 = inlined_call_operand.hbm [shape: bf16[256,512], index: 3, kind: input, shape index: {}]
  %s4 = inlined_call_operand.vmem [shape: f32[1,512], index: 4, kind: input, shape index: {}]
  %s5 = inlined_call_operand.hbm [shape: bf16[512,128], index: 5, kind: input, shape index: {}]
  %s6 = inlined_call_operand.vmem [shape: f32[1,128], index: 6, kind: input, shape index: {}]
  %s7 = inlined_call_operand.vmem [shape: f32[16,128], index: 7, kind: output, shape index: {}]
  %s8 = sld [smem:[#allocation0]]
  $region50: #{net_forward.1} parent=0
    _
  %s10 = ssub.s32 1, %s8
  %s11 = scalar_select 0, %s10, %s8
  $region1: #{net_forward.1} parent=0
    #allocation2 [shape = 'u8[16384]{0}', space=vmem, size = 0x4000, scoped, tag = 'input window, operand 1, single buffered']
    #allocation3 [shape = 's32[1]{0}', space=sflag, size = 0x4, scoped, tag = 'scoped memory for net_forward.1']
    #allocation4 [shape = 'u8[262144]{0}', space=vmem, size = 0x40000, scoped, tag = 'input window, operand 3, single buffered']
    #allocation5 [shape = 's32[1]{0}', space=sflag, size = 0x4, scoped, tag = 'scoped memory for net_forward.1']
    #allocation6 [shape = 'u8[131072]{0}', space=vmem, size = 0x20000, scoped, tag = 'input window, operand 5, single buffered']
    %12 = vsyncpa [#allocation3], 0
    %13 = vsyncpa [#allocation5], 0
    // Predicated region
    $region2: #{net_forward.1} parent=1 // pred_check
      _
    $region3: #{net_forward.1} parent=1 // pred_check_branch
      %15 = sbr.rel (0) target = $region5
    $region4: #{net_forward.1} parent=1 // pred_region
      _
    $region5: #{net_forward.1} parent=1 // pred_fallthru
      _
    // Predicated region
    $region6: #{net_forward.1} parent=1 // pred_check
      _
    $region7: #{net_forward.1} parent=1 // pred_check_branch
      %17 = sbr.rel (0) target = $region9
    $region8: #{net_forward.1} parent=1 // pred_region
      %s19 = ssub.s32 512, 512
      %20 = vsyncadd [#allocation3], %s19
      %s21 = sshll.u32 [#allocation2], 4
      %s22 = int_to_ptr.vmem [resolvable:$true] %s21
      %27 = dma.hbm_to_vmem [thread:$0]  %s1, 512, %s22, [#allocation3], 128, 128, 8
    $region9: #{net_forward.1} parent=1 // pred_fallthru
      _
    // Predicated region
    $region10: #{net_forward.1} parent=1 // pred_check
      _
    $region11: #{net_forward.1} parent=1 // pred_check_branch
      %29 = sbr.rel (0) target = $region13
    $region12: #{net_forward.1} parent=1 // pred_region
      _
    $region13: #{net_forward.1} parent=1 // pred_fallthru
      _
    // Predicated region
    $region14: #{net_forward.1} parent=1 // pred_check
      _
    $region15: #{net_forward.1} parent=1 // pred_check_branch
      %31 = sbr.rel (0) target = $region17
    $region16: #{net_forward.1} parent=1 // pred_region
      %s33 = ssub.s32 8192, 8192
      %34 = vsyncadd [#allocation5], %s33
      %s35 = sshll.u32 [#allocation4], 4
      %s36 = int_to_ptr.vmem [resolvable:$true] %s35
      %41 = dma.hbm_to_vmem [thread:$0]  %s3, 8192, %s36, [#allocation5], 256, 256, 16
    $region17: #{net_forward.1} parent=1 // pred_fallthru
      _
    // Predicated region
    $region18: #{net_forward.1} parent=1 // pred_check
      _
    $region19: #{net_forward.1} parent=1 // pred_check_branch
      %43 = sbr.rel (0) target = $region21
    $region20: #{net_forward.1} parent=1 // pred_region
      _
    $region21: #{net_forward.1} parent=1 // pred_fallthru
      _
    // Predicated region
    $region22: #{net_forward.1} parent=1 // pred_check
      _
    $region23: #{net_forward.1} parent=1 // pred_check_branch
      %45 = sbr.rel (0) target = $region25
    $region24: #{net_forward.1} parent=1 // pred_region
      %s47 = ssub.s32 4096, 4096
      %48 = vsyncadd [#allocation5], %s47
      %s49 = sshll.u32 [#allocation6], 4
      %s50 = int_to_ptr.vmem [resolvable:$true] %s49
      %55 = dma.hbm_to_vmem [thread:$0]  %s5, 4096, %s50, [#allocation5], 64, 64, 4
    $region25: #{net_forward.1} parent=1 // pred_fallthru
      _
    // Predicated region
    $region26: #{net_forward.1} parent=1 // pred_check
      _
    $region27: #{net_forward.1} parent=1 // pred_check_branch
      %57 = sbr.rel (0) target = $region29
    $region28: #{net_forward.1} parent=1 // pred_region
      _
    $region29: #{net_forward.1} parent=1 // pred_fallthru
      _
    // Predicated region
    $region30: #{net_forward.1} parent=1 // pred_check
      _
    $region31: #{net_forward.1} parent=1 // pred_check_branch
      %59 = sbr.rel (0) target = $region33
    $region32: #{net_forward.1} parent=1 // pred_region
      %60 = dma.done [#allocation3], 512
    $region33: #{net_forward.1} parent=1 // pred_fallthru
      _
    // Predicated region
    $region34: #{net_forward.1} parent=1 // pred_check
      _
    $region35: #{net_forward.1} parent=1 // pred_check_branch
      %62 = sbr.rel (0) target = $region37
    $region36: #{net_forward.1} parent=1 // pred_region
      %63 = dma.done [#allocation5], 8192
    $region37: #{net_forward.1} parent=1 // pred_fallthru
      _
    // Predicated region
    $region38: #{net_forward.1} parent=1 // pred_check
      _
    $region39: #{net_forward.1} parent=1 // pred_check_branch
      %65 = sbr.rel (0) target = $region41
    $region40: #{net_forward.1} parent=1 // pred_region
      %66 = dma.done [#allocation5], 4096
    $region41: #{net_forward.1} parent=1 // pred_fallthru
      _
    %v68 = vld [vmem:[%s0] sm:$0xf]
    %v69 = vld [vmem:[%s0 + $0x4] sm:$0xf]
    %v70 = vld [vmem:[#allocation2] sm:$0xff]
    %v71 = vld [vmem:[#allocation2 + $0x8] sm:$0xff]
    %v72 = vld [vmem:[#allocation2 + $0x10] sm:$0xff]
    %v73 = vld [vmem:[#allocation2 + $0x18] sm:$0xff]
    %v74 = vld [vmem:[%s2] sm:$0x3]
    %v76 = vlaneseq
    %v77 = vshrl.u32 %v76, 7
    %v78 = vsub.s32 0, %v77
    %v79 = vrot.slane %v74, %v78
    %v80 = vlaneseq
    %v81 = vshrl.u32 %v80, 7
    %v82 = vsub.s32 1, %v81
    %v83 = vrot.slane %v74, %v82
    %v88 = vunpack.c.l.b16 %v68
    %v89 = vunpack.c.l.b16 %v69
    %v90 = vpack.c.b16 %v89, %v88
    %v95 = vunpack.c.l.b16 %v70
    %v96 = vunpack.c.h.b16 %v70
    %v97 = vunpack.c.l.b16 %v71
    %v98 = vunpack.c.h.b16 %v71
    %v99 = vunpack.c.l.b16 %v72
    %v100 = vunpack.c.h.b16 %v72
    %v101 = vunpack.c.l.b16 %v73
    %v102 = vunpack.c.h.b16 %v73
    %v103 = vpack.c.b16 %v97, %v95
    %v104 = vpack.c.b16 %v98, %v96
    %v105 = vpack.c.b16 %v101, %v99
    %v106 = vpack.c.b16 %v102, %v100
    %vm111 = vcmask 261120
    %v113 = vsel %vm111, %v90, 0
    %115 = vmatprep.subr.bf16.mxu0 0
    %116 = vmatpush1.bf16.msra.mxu0 0
    %117 = vmatprep.subr.bf16.mxu0 0
    %118 = vmatpush1.bf16.msra.mxu0 0
    %119 = vmatprep.subr.bf16.mxu0 0
    %120 = vmatpush1.bf16.msra.mxu0 0
    %121 = vmatprep.subr.bf16.mxu0 0
    %122 = vmatpush1.bf16.msra.mxu0 0
    %123 = vmatprep.subr.bf16.mxu0 0
    %124 = vmatpush1.bf16.msra.mxu0 0
    %125 = vmatprep.subr.bf16.mxu0 0
    %126 = vmatpush1.bf16.msra.mxu0 0
    %127 = vmatprep.subr.bf16.mxu0 %v106
    %128 = vmatpush1.bf16.msra.mxu0 %v105
    %129 = vmatprep.subr.bf16.mxu0 %v104
    %130 = vmatpush1.bf16.msra.mxu0 %v103
    %131 = vmatprep.subr.bf16.mxu0 0
    %132 = vmatpush2.bf16.msra.mxu0 0
    %133 = vmatprep.subr.bf16.mxu0 0
    %134 = vmatpush2.bf16.msra.mxu0 0
    %135 = vmatprep.subr.bf16.mxu0 0
    %136 = vmatpush2.bf16.msra.mxu0 0
    %137 = vmatprep.subr.bf16.mxu0 0
    %138 = vmatpush2.bf16.msra.mxu0 0
    %139 = vmatprep.subr.bf16.mxu0 0
    %140 = vmatpush2.bf16.msra.mxu0 0
    %141 = vmatprep.subr.bf16.mxu0 0
    %142 = vmatpush2.bf16.msra.mxu0 0
    %143 = vmatprep.subr.bf16.mxu0 0
    %144 = vmatpush2.bf16.msra.mxu0 0
    %145 = vmatprep.subr.bf16.mxu0 0
    %146 = vmatpush2.bf16.msra.mxu0 0
    %147 = vmatprep.mubr.bf16.mxu0 0
    %148 = vmatmul.mubr.bf16.gmra.mxu0 %v113
    %v149 = vpop.f32.mrf.mxu0
    %v150 = vadd.f32 %v79, %v149
    %v151 = vpop.f32.mrf.mxu0
    %v152 = vadd.f32 %v83, %v151
    %v153 = vpop.f32.mrf.mxu0
    %v154 = vadd.f32 %v79, %v153
    %v155 = vpop.f32.mrf.mxu0
    %v156 = vadd.f32 %v83, %v155
    %157 = vdwg.mxu0
    %v158 = vmax.f32 %v150, 0.0
    %v159 = vmax.f32 %v152, 0.0
    %v160 = vmax.f32 %v154, 0.0
    %v161 = vmax.f32 %v156, 0.0
    %v162 = vpack.c.bf16 %v160, %v158
    %v163 = vpack.c.bf16 %v161, %v159
    %v164 = vld [vmem:[#allocation4] sm:$0xff]
    %v165 = vld [vmem:[#allocation4 + $0x8] sm:$0xff]
    %v166 = vld [vmem:[#allocation4 + $0x10] sm:$0xff]
    %v167 = vld [vmem:[#allocation4 + $0x18] sm:$0xff]
    %v168 = vld [vmem:[#allocation4 + $0x20] sm:$0xff]
    %v169 = vld [vmem:[#allocation4 + $0x28] sm:$0xff]
    %v170 = vld [vmem:[#allocation4 + $0x30] sm:$0xff]
    %v171 = vld [vmem:[#allocation4 + $0x38] sm:$0xff]
    %v172 = vld [vmem:[#allocation4 + $0x40] sm:$0xff]
    %v173 = vld [vmem:[#allocation4 + $0x48] sm:$0xff]
    %v174 = vld [vmem:[#allocation4 + $0x50] sm:$0xff]
    %v175 = vld [vmem:[#allocation4 + $0x58] sm:$0xff]
    %v176 = vld [vmem:[#allocation4 + $0x60] sm:$0xff]
    %v177 = vld [vmem:[#allocation4 + $0x68] sm:$0xff]
    %v178 = vld [vmem:[#allocation4 + $0x70] sm:$0xff]
    %v179 = vld [vmem:[#allocation4 + $0x78] sm:$0xff]
    %v180 = vld [vmem:[#allocation4 + $0x80] sm:$0xff]
    %v181 = vld [vmem:[#allocation4 + $0x88] sm:$0xff]
    %v182 = vld [vmem:[#allocation4 + $0x90] sm:$0xff]
    %v183 = vld [vmem:[#allocation4 + $0x98] sm:$0xff]
    %v184 = vld [vmem:[#allocation4 + $0xa0] sm:$0xff]
    %v185 = vld [vmem:[#allocation4 + $0xa8] sm:$0xff]
    %v186 = vld [vmem:[#allocation4 + $0xb0] sm:$0xff]
    %v187 = vld [vmem:[#allocation4 + $0xb8] sm:$0xff]
    %v188 = vld [vmem:[#allocation4 + $0xc0] sm:$0xff]
    %v189 = vld [vmem:[#allocation4 + $0xc8] sm:$0xff]
    %v190 = vld [vmem:[#allocation4 + $0xd0] sm:$0xff]
    %v191 = vld [vmem:[#allocation4 + $0xd8] sm:$0xff]
    %v192 = vld [vmem:[#allocation4 + $0xe0] sm:$0xff]
    %v193 = vld [vmem:[#allocation4 + $0xe8] sm:$0xff]
    %v194 = vld [vmem:[#allocation4 + $0xf0] sm:$0xff]
    %v195 = vld [vmem:[#allocation4 + $0xf8] sm:$0xff]
    %v196 = vld [vmem:[#allocation4 + $0x100] sm:$0xff]
    %v197 = vld [vmem:[#allocation4 + $0x108] sm:$0xff]
    %v198 = vld [vmem:[#allocation4 + $0x110] sm:$0xff]
    %v199 = vld [vmem:[#allocation4 + $0x118] sm:$0xff]
    %v200 = vld [vmem:[#allocation4 + $0x120] sm:$0xff]
    %v201 = vld [vmem:[#allocation4 + $0x128] sm:$0xff]
    %v202 = vld [vmem:[#allocation4 + $0x130] sm:$0xff]
    %v203 = vld [vmem:[#allocation4 + $0x138] sm:$0xff]
    %v204 = vld [vmem:[#allocation4 + $0x140] sm:$0xff]
    %v205 = vld [vmem:[#allocation4 + $0x148] sm:$0xff]
    %v206 = vld [vmem:[#allocation4 + $0x150] sm:$0xff]
    %v207 = vld [vmem:[#allocation4 + $0x158] sm:$0xff]
    %v208 = vld [vmem:[#allocation4 + $0x160] sm:$0xff]
    %v209 = vld [vmem:[#allocation4 + $0x168] sm:$0xff]
    %v210 = vld [vmem:[#allocation4 + $0x170] sm:$0xff]
    %v211 = vld [vmem:[#allocation4 + $0x178] sm:$0xff]
    %v212 = vld [vmem:[#allocation4 + $0x180] sm:$0xff]
    %v213 = vld [vmem:[#allocation4 + $0x188] sm:$0xff]
    %v214 = vld [vmem:[#allocation4 + $0x190] sm:$0xff]
    %v215 = vld [vmem:[#allocation4 + $0x198] sm:$0xff]
    %v216 = vld [vmem:[#allocation4 + $0x1a0] sm:$0xff]
    %v217 = vld [vmem:[#allocation4 + $0x1a8] sm:$0xff]
    %v218 = vld [vmem:[#allocation4 + $0x1b0] sm:$0xff]
    %v219 = vld [vmem:[#allocation4 + $0x1b8] sm:$0xff]
    %v220 = vld [vmem:[#allocation4 + $0x1c0] sm:$0xff]
    %v221 = vld [vmem:[#allocation4 + $0x1c8] sm:$0xff]
    %v222 = vld [vmem:[#allocation4 + $0x1d0] sm:$0xff]
    %v223 = vld [vmem:[#allocation4 + $0x1d8] sm:$0xff]
    %v224 = vld [vmem:[#allocation4 + $0x1e0] sm:$0xff]
    %v225 = vld [vmem:[#allocation4 + $0x1e8] sm:$0xff]
    %v226 = vld [vmem:[#allocation4 + $0x1f0] sm:$0xff]
    %v227 = vld [vmem:[#allocation4 + $0x1f8] sm:$0xff]
    %v228 = vld [vmem:[%s4] sm:$0xf]
    %v230 = vlaneseq
    %v231 = vshrl.u32 %v230, 7
    %v232 = vsub.s32 0, %v231
    %v233 = vrot.slane %v228, %v232
    %v234 = vlaneseq
    %v235 = vshrl.u32 %v234, 7
    %v236 = vsub.s32 1, %v235
    %v237 = vrot.slane %v228, %v236
    %v238 = vlaneseq
    %v239 = vshrl.u32 %v238, 7
    %v240 = vsub.s32 2, %v239
    %v241 = vrot.slane %v228, %v240
    %v242 = vlaneseq
    %v243 = vshrl.u32 %v242, 7
    %v244 = vsub.s32 3, %v243
    %v245 = vrot.slane %v228, %v244
    %v314 = vunpack.c.l.b16 %v164
    %v315 = vunpack.c.h.b16 %v164
    %v316 = vunpack.c.l.b16 %v165
    %v317 = vunpack.c.h.b16 %v165
    %v318 = vunpack.c.l.b16 %v166
    %v319 = vunpack.c.h.b16 %v166
    %v320 = vunpack.c.l.b16 %v167
    %v321 = vunpack.c.h.b16 %v167
    %v322 = vunpack.c.l.b16 %v168
    %v323 = vunpack.c.h.b16 %v168
    %v324 = vunpack.c.l.b16 %v169
    %v325 = vunpack.c.h.b16 %v169
    %v326 = vunpack.c.l.b16 %v170
    %v327 = vunpack.c.h.b16 %v170
    %v328 = vunpack.c.l.b16 %v171
    %v329 = vunpack.c.h.b16 %v171
    %v330 = vunpack.c.l.b16 %v172
    %v331 = vunpack.c.h.b16 %v172
    %v332 = vunpack.c.l.b16 %v173
    %v333 = vunpack.c.h.b16 %v173
    %v334 = vunpack.c.l.b16 %v174
    %v335 = vunpack.c.h.b16 %v174
    %v336 = vunpack.c.l.b16 %v175
    %v337 = vunpack.c.h.b16 %v175
    %v338 = vunpack.c.l.b16 %v176
    %v339 = vunpack.c.h.b16 %v176
    %v340 = vunpack.c.l.b16 %v177
    %v341 = vunpack.c.h.b16 %v177
    %v342 = vunpack.c.l.b16 %v178
    %v343 = vunpack.c.h.b16 %v178
    %v344 = vunpack.c.l.b16 %v179
    %v345 = vunpack.c.h.b16 %v179
    %v346 = vunpack.c.l.b16 %v180
    %v347 = vunpack.c.h.b16 %v180
    %v348 = vunpack.c.l.b16 %v181
    %v349 = vunpack.c.h.b16 %v181
    %v350 = vunpack.c.l.b16 %v182
    %v351 = vunpack.c.h.b16 %v182
    %v352 = vunpack.c.l.b16 %v183
    %v353 = vunpack.c.h.b16 %v183
    %v354 = vunpack.c.l.b16 %v184
    %v355 = vunpack.c.h.b16 %v184
    %v356 = vunpack.c.l.b16 %v185
    %v357 = vunpack.c.h.b16 %v185
    %v358 = vunpack.c.l.b16 %v186
    %v359 = vunpack.c.h.b16 %v186
    %v360 = vunpack.c.l.b16 %v187
    %v361 = vunpack.c.h.b16 %v187
    %v362 = vunpack.c.l.b16 %v188
    %v363 = vunpack.c.h.b16 %v188
    %v364 = vunpack.c.l.b16 %v189
    %v365 = vunpack.c.h.b16 %v189
    %v366 = vunpack.c.l.b16 %v190
    %v367 = vunpack.c.h.b16 %v190
    %v368 = vunpack.c.l.b16 %v191
    %v369 = vunpack.c.h.b16 %v191
    %v370 = vunpack.c.l.b16 %v192
    %v371 = vunpack.c.h.b16 %v192
    %v372 = vunpack.c.l.b16 %v193
    %v373 = vunpack.c.h.b16 %v193
    %v374 = vunpack.c.l.b16 %v194
    %v375 = vunpack.c.h.b16 %v194
    %v376 = vunpack.c.l.b16 %v195
    %v377 = vunpack.c.h.b16 %v195
    %v378 = vunpack.c.l.b16 %v196
    %v379 = vunpack.c.h.b16 %v196
    %v380 = vunpack.c.l.b16 %v197
    %v381 = vunpack.c.h.b16 %v197
    %v382 = vunpack.c.l.b16 %v198
    %v383 = vunpack.c.h.b16 %v198
    %v384 = vunpack.c.l.b16 %v199
    %v385 = vunpack.c.h.b16 %v199
    %v386 = vunpack.c.l.b16 %v200
    %v387 = vunpack.c.h.b16 %v200
    %v388 = vunpack.c.l.b16 %v201
    %v389 = vunpack.c.h.b16 %v201
    %v390 = vunpack.c.l.b16 %v202
    %v391 = vunpack.c.h.b16 %v202
    %v392 = vunpack.c.l.b16 %v203
    %v393 = vunpack.c.h.b16 %v203
    %v394 = vunpack.c.l.b16 %v204
    %v395 = vunpack.c.h.b16 %v204
    %v396 = vunpack.c.l.b16 %v205
    %v397 = vunpack.c.h.b16 %v205
    %v398 = vunpack.c.l.b16 %v206
    %v399 = vunpack.c.h.b16 %v206
    %v400 = vunpack.c.l.b16 %v207
    %v401 = vunpack.c.h.b16 %v207
    %v402 = vunpack.c.l.b16 %v208
    %v403 = vunpack.c.h.b16 %v208
    %v404 = vunpack.c.l.b16 %v209
    %v405 = vunpack.c.h.b16 %v209
    %v406 = vunpack.c.l.b16 %v210
    %v407 = vunpack.c.h.b16 %v210
    %v408 = vunpack.c.l.b16 %v211
    %v409 = vunpack.c.h.b16 %v211
    %v410 = vunpack.c.l.b16 %v212
    %v411 = vunpack.c.h.b16 %v212
    %v412 = vunpack.c.l.b16 %v213
    %v413 = vunpack.c.h.b16 %v213
    %v414 = vunpack.c.l.b16 %v214
    %v415 = vunpack.c.h.b16 %v214
    %v416 = vunpack.c.l.b16 %v215
    %v417 = vunpack.c.h.b16 %v215
    %v418 = vunpack.c.l.b16 %v216
    %v419 = vunpack.c.h.b16 %v216
    %v420 = vunpack.c.l.b16 %v217
    %v421 = vunpack.c.h.b16 %v217
    %v422 = vunpack.c.l.b16 %v218
    %v423 = vunpack.c.h.b16 %v218
    %v424 = vunpack.c.l.b16 %v219
    %v425 = vunpack.c.h.b16 %v219
    %v426 = vunpack.c.l.b16 %v220
    %v427 = vunpack.c.h.b16 %v220
    %v428 = vunpack.c.l.b16 %v221
    %v429 = vunpack.c.h.b16 %v221
    %v430 = vunpack.c.l.b16 %v222
    %v431 = vunpack.c.h.b16 %v222
    %v432 = vunpack.c.l.b16 %v223
    %v433 = vunpack.c.h.b16 %v223
    %v434 = vunpack.c.l.b16 %v224
    %v435 = vunpack.c.h.b16 %v224
    %v436 = vunpack.c.l.b16 %v225
    %v437 = vunpack.c.h.b16 %v225
    %v438 = vunpack.c.l.b16 %v226
    %v439 = vunpack.c.h.b16 %v226
    %v440 = vunpack.c.l.b16 %v227
    %v441 = vunpack.c.h.b16 %v227
    %v442 = vpack.c.b16 %v318, %v314
    %v443 = vpack.c.b16 %v319, %v315
    %v444 = vpack.c.b16 %v320, %v316
    %v445 = vpack.c.b16 %v321, %v317
    %v446 = vpack.c.b16 %v326, %v322
    %v447 = vpack.c.b16 %v327, %v323
    %v448 = vpack.c.b16 %v328, %v324
    %v449 = vpack.c.b16 %v329, %v325
    %v450 = vpack.c.b16 %v334, %v330
    %v451 = vpack.c.b16 %v335, %v331
    %v452 = vpack.c.b16 %v336, %v332
    %v453 = vpack.c.b16 %v337, %v333
    %v454 = vpack.c.b16 %v342, %v338
    %v455 = vpack.c.b16 %v343, %v339
    %v456 = vpack.c.b16 %v344, %v340
    %v457 = vpack.c.b16 %v345, %v341
    %v458 = vpack.c.b16 %v350, %v346
    %v459 = vpack.c.b16 %v351, %v347
    %v460 = vpack.c.b16 %v352, %v348
    %v461 = vpack.c.b16 %v353, %v349
    %v462 = vpack.c.b16 %v358, %v354
    %v463 = vpack.c.b16 %v359, %v355
    %v464 = vpack.c.b16 %v360, %v356
    %v465 = vpack.c.b16 %v361, %v357
    %v466 = vpack.c.b16 %v366, %v362
    %v467 = vpack.c.b16 %v367, %v363
    %v468 = vpack.c.b16 %v368, %v364
    %v469 = vpack.c.b16 %v369, %v365
    %v470 = vpack.c.b16 %v374, %v370
    %v471 = vpack.c.b16 %v375, %v371
    %v472 = vpack.c.b16 %v376, %v372
    %v473 = vpack.c.b16 %v377, %v373
    %v474 = vpack.c.b16 %v382, %v378
    %v475 = vpack.c.b16 %v383, %v379
    %v476 = vpack.c.b16 %v384, %v380
    %v477 = vpack.c.b16 %v385, %v381
    %v478 = vpack.c.b16 %v390, %v386
    %v479 = vpack.c.b16 %v391, %v387
    %v480 = vpack.c.b16 %v392, %v388
    %v481 = vpack.c.b16 %v393, %v389
    %v482 = vpack.c.b16 %v398, %v394
    %v483 = vpack.c.b16 %v399, %v395
    %v484 = vpack.c.b16 %v400, %v396
    %v485 = vpack.c.b16 %v401, %v397
    %v486 = vpack.c.b16 %v406, %v402
    %v487 = vpack.c.b16 %v407, %v403
    %v488 = vpack.c.b16 %v408, %v404
    %v489 = vpack.c.b16 %v409, %v405
    %v490 = vpack.c.b16 %v414, %v410
    %v491 = vpack.c.b16 %v415, %v411
    %v492 = vpack.c.b16 %v416, %v412
    %v493 = vpack.c.b16 %v417, %v413
    %v494 = vpack.c.b16 %v422, %v418
    %v495 = vpack.c.b16 %v423, %v419
    %v496 = vpack.c.b16 %v424, %v420
    %v497 = vpack.c.b16 %v425, %v421
    %v498 = vpack.c.b16 %v430, %v426
    %v499 = vpack.c.b16 %v431, %v427
    %v500 = vpack.c.b16 %v432, %v428
    %v501 = vpack.c.b16 %v433, %v429
    %v502 = vpack.c.b16 %v438, %v434
    %v503 = vpack.c.b16 %v439, %v435
    %v504 = vpack.c.b16 %v440, %v436
    %v505 = vpack.c.b16 %v441, %v437
    %570 = vmatprep.subr.bf16.mxu0 %v471
    %571 = vmatpush1.bf16.msra.mxu0 %v470
    %572 = vmatprep.subr.bf16.mxu0 %v467
    %573 = vmatpush1.bf16.msra.mxu0 %v466
    %574 = vmatprep.subr.bf16.mxu0 %v463
    %575 = vmatpush1.bf16.msra.mxu0 %v462
    %576 = vmatprep.subr.bf16.mxu0 %v459
    %577 = vmatpush1.bf16.msra.mxu0 %v458
    %578 = vmatprep.subr.bf16.mxu0 %v455
    %579 = vmatpush1.bf16.msra.mxu0 %v454
    %580 = vmatprep.subr.bf16.mxu0 %v451
    %581 = vmatpush1.bf16.msra.mxu0 %v450
    %582 = vmatprep.subr.bf16.mxu0 %v447
    %583 = vmatpush1.bf16.msra.mxu0 %v446
    %584 = vmatprep.subr.bf16.mxu0 %v443
    %585 = vmatpush1.bf16.msra.mxu0 %v442
    %586 = vmatprep.subr.bf16.mxu0 %v503
    %587 = vmatpush2.bf16.msra.mxu0 %v502
    %588 = vmatprep.subr.bf16.mxu0 %v499
    %589 = vmatpush2.bf16.msra.mxu0 %v498
    %590 = vmatprep.subr.bf16.mxu0 %v495
    %591 = vmatpush2.bf16.msra.mxu0 %v494
    %592 = vmatprep.subr.bf16.mxu0 %v491
    %593 = vmatpush2.bf16.msra.mxu0 %v490
    %594 = vmatprep.subr.bf16.mxu0 %v487
    %595 = vmatpush2.bf16.msra.mxu0 %v486
    %596 = vmatprep.subr.bf16.mxu0 %v483
    %597 = vmatpush2.bf16.msra.mxu0 %v482
    %598 = vmatprep.subr.bf16.mxu0 %v479
    %599 = vmatpush2.bf16.msra.mxu0 %v478
    %600 = vmatprep.subr.bf16.mxu0 %v475
    %601 = vmatpush2.bf16.msra.mxu0 %v474
    %602 = vmatprep.mubr.bf16.mxu0 %v163
    %603 = vmatmul.mubr.bf16.gmra.mxu0 %v162
    %v604 = vpop.f32.mrf.mxu0
    %v605 = vadd.f32 %v233, %v604
    %v606 = vpop.f32.mrf.mxu0
    %v607 = vadd.f32 %v237, %v606
    %v608 = vpop.f32.mrf.mxu0
    %v609 = vadd.f32 %v233, %v608
    %v610 = vpop.f32.mrf.mxu0
    %v611 = vadd.f32 %v237, %v610
    %612 = vdwg.mxu0
    %613 = vmatprep.subr.bf16.mxu0 %v473
    %614 = vmatpush1.bf16.msra.mxu0 %v472
    %615 = vmatprep.subr.bf16.mxu0 %v469
    %616 = vmatpush1.bf16.msra.mxu0 %v468
    %617 = vmatprep.subr.bf16.mxu0 %v465
    %618 = vmatpush1.bf16.msra.mxu0 %v464
    %619 = vmatprep.subr.bf16.mxu0 %v461
    %620 = vmatpush1.bf16.msra.mxu0 %v460
    %621 = vmatprep.subr.bf16.mxu0 %v457
    %622 = vmatpush1.bf16.msra.mxu0 %v456
    %623 = vmatprep.subr.bf16.mxu0 %v453
    %624 = vmatpush1.bf16.msra.mxu0 %v452
    %625 = vmatprep.subr.bf16.mxu0 %v449
    %626 = vmatpush1.bf16.msra.mxu0 %v448
    %627 = vmatprep.subr.bf16.mxu0 %v445
    %628 = vmatpush1.bf16.msra.mxu0 %v444
    %629 = vmatprep.subr.bf16.mxu0 %v505
    %630 = vmatpush2.bf16.msra.mxu0 %v504
    %631 = vmatprep.subr.bf16.mxu0 %v501
    %632 = vmatpush2.bf16.msra.mxu0 %v500
    %633 = vmatprep.subr.bf16.mxu0 %v497
    %634 = vmatpush2.bf16.msra.mxu0 %v496
    %635 = vmatprep.subr.bf16.mxu0 %v493
    %636 = vmatpush2.bf16.msra.mxu0 %v492
    %637 = vmatprep.subr.bf16.mxu0 %v489
    %638 = vmatpush2.bf16.msra.mxu0 %v488
    %639 = vmatprep.subr.bf16.mxu0 %v485
    %640 = vmatpush2.bf16.msra.mxu0 %v484
    %641 = vmatprep.subr.bf16.mxu0 %v481
    %642 = vmatpush2.bf16.msra.mxu0 %v480
    %643 = vmatprep.subr.bf16.mxu0 %v477
    %644 = vmatpush2.bf16.msra.mxu0 %v476
    %645 = vmatprep.mubr.bf16.mxu0 %v163
    %646 = vmatmul.mubr.bf16.gmra.mxu0 %v162
    %v647 = vpop.f32.mrf.mxu0
    %v648 = vadd.f32 %v241, %v647
    %v649 = vpop.f32.mrf.mxu0
    %v650 = vadd.f32 %v245, %v649
    %v651 = vpop.f32.mrf.mxu0
    %v652 = vadd.f32 %v241, %v651
    %v653 = vpop.f32.mrf.mxu0
    %v654 = vadd.f32 %v245, %v653
    %655 = vdwg.mxu0
    %v656 = vmax.f32 %v605, 0.0
    %v657 = vmax.f32 %v607, 0.0
    %v658 = vmax.f32 %v648, 0.0
    %v659 = vmax.f32 %v650, 0.0
    %v660 = vmax.f32 %v609, 0.0
    %v661 = vmax.f32 %v611, 0.0
    %v662 = vmax.f32 %v652, 0.0
    %v663 = vmax.f32 %v654, 0.0
    %v664 = vpack.c.bf16 %v660, %v656
    %v665 = vpack.c.bf16 %v661, %v657
    %v666 = vpack.c.bf16 %v662, %v658
    %v667 = vpack.c.bf16 %v663, %v659
    %v668 = vld [vmem:[#allocation6] sm:$0xf]
    %v669 = vld [vmem:[#allocation6 + $0x4] sm:$0xf]
    %v670 = vld [vmem:[#allocation6 + $0x8] sm:$0xf]
    %v671 = vld [vmem:[#allocation6 + $0xc] sm:$0xf]
    %v672 = vld [vmem:[#allocation6 + $0x10] sm:$0xf]
    %v673 = vld [vmem:[#allocation6 + $0x14] sm:$0xf]
    %v674 = vld [vmem:[#allocation6 + $0x18] sm:$0xf]
    %v675 = vld [vmem:[#allocation6 + $0x1c] sm:$0xf]
    %v676 = vld [vmem:[#allocation6 + $0x20] sm:$0xf]
    %v677 = vld [vmem:[#allocation6 + $0x24] sm:$0xf]
    %v678 = vld [vmem:[#allocation6 + $0x28] sm:$0xf]
    %v679 = vld [vmem:[#allocation6 + $0x2c] sm:$0xf]
    %v680 = vld [vmem:[#allocation6 + $0x30] sm:$0xf]
    %v681 = vld [vmem:[#allocation6 + $0x34] sm:$0xf]
    %v682 = vld [vmem:[#allocation6 + $0x38] sm:$0xf]
    %v683 = vld [vmem:[#allocation6 + $0x3c] sm:$0xf]
    %v684 = vld [vmem:[#allocation6 + $0x40] sm:$0xf]
    %v685 = vld [vmem:[#allocation6 + $0x44] sm:$0xf]
    %v686 = vld [vmem:[#allocation6 + $0x48] sm:$0xf]
    %v687 = vld [vmem:[#allocation6 + $0x4c] sm:$0xf]
    %v688 = vld [vmem:[#allocation6 + $0x50] sm:$0xf]
    %v689 = vld [vmem:[#allocation6 + $0x54] sm:$0xf]
    %v690 = vld [vmem:[#allocation6 + $0x58] sm:$0xf]
    %v691 = vld [vmem:[#allocation6 + $0x5c] sm:$0xf]
    %v692 = vld [vmem:[#allocation6 + $0x60] sm:$0xf]
    %v693 = vld [vmem:[#allocation6 + $0x64] sm:$0xf]
    %v694 = vld [vmem:[#allocation6 + $0x68] sm:$0xf]
    %v695 = vld [vmem:[#allocation6 + $0x6c] sm:$0xf]
    %v696 = vld [vmem:[#allocation6 + $0x70] sm:$0xf]
    %v697 = vld [vmem:[#allocation6 + $0x74] sm:$0xf]
    %v698 = vld [vmem:[#allocation6 + $0x78] sm:$0xf]
    %v699 = vld [vmem:[#allocation6 + $0x7c] sm:$0xf]
    %v700 = vld [vmem:[#allocation6 + $0x80] sm:$0xf]
    %v701 = vld [vmem:[#allocation6 + $0x84] sm:$0xf]
    %v702 = vld [vmem:[#allocation6 + $0x88] sm:$0xf]
    %v703 = vld [vmem:[#allocation6 + $0x8c] sm:$0xf]
    %v704 = vld [vmem:[#allocation6 + $0x90] sm:$0xf]
    %v705 = vld [vmem:[#allocation6 + $0x94] sm:$0xf]
    %v706 = vld [vmem:[#allocation6 + $0x98] sm:$0xf]
    %v707 = vld [vmem:[#allocation6 + $0x9c] sm:$0xf]
    %v708 = vld [vmem:[#allocation6 + $0xa0] sm:$0xf]
    %v709 = vld [vmem:[#allocation6 + $0xa4] sm:$0xf]
    %v710 = vld [vmem:[#allocation6 + $0xa8] sm:$0xf]
    %v711 = vld [vmem:[#allocation6 + $0xac] sm:$0xf]
    %v712 = vld [vmem:[#allocation6 + $0xb0] sm:$0xf]
    %v713 = vld [vmem:[#allocation6 + $0xb4] sm:$0xf]
    %v714 = vld [vmem:[#allocation6 + $0xb8] sm:$0xf]
    %v715 = vld [vmem:[#allocation6 + $0xbc] sm:$0xf]
    %v716 = vld [vmem:[#allocation6 + $0xc0] sm:$0xf]
    %v717 = vld [vmem:[#allocation6 + $0xc4] sm:$0xf]
    %v718 = vld [vmem:[#allocation6 + $0xc8] sm:$0xf]
    %v719 = vld [vmem:[#allocation6 + $0xcc] sm:$0xf]
    %v720 = vld [vmem:[#allocation6 + $0xd0] sm:$0xf]
    %v721 = vld [vmem:[#allocation6 + $0xd4] sm:$0xf]
    %v722 = vld [vmem:[#allocation6 + $0xd8] sm:$0xf]
    %v723 = vld [vmem:[#allocation6 + $0xdc] sm:$0xf]
    %v724 = vld [vmem:[#allocation6 + $0xe0] sm:$0xf]
    %v725 = vld [vmem:[#allocation6 + $0xe4] sm:$0xf]
    %v726 = vld [vmem:[#allocation6 + $0xe8] sm:$0xf]
    %v727 = vld [vmem:[#allocation6 + $0xec] sm:$0xf]
    %v728 = vld [vmem:[#allocation6 + $0xf0] sm:$0xf]
    %v729 = vld [vmem:[#allocation6 + $0xf4] sm:$0xf]
    %v730 = vld [vmem:[#allocation6 + $0xf8] sm:$0xf]
    %v731 = vld [vmem:[#allocation6 + $0xfc] sm:$0xf]
    %v732 = vld [vmem:[%s6] sm:$0x1]
    %v734 = vlaneseq
    %v735 = vshrl.u32 %v734, 7
    %v736 = vsub.s32 0, %v735
    %v737 = vrot.slane %v732, %v736
    %v803 = vunpack.c.l.b16 %v668
    %v804 = vunpack.c.l.b16 %v669
    %v805 = vunpack.c.l.b16 %v670
    %v806 = vunpack.c.l.b16 %v671
    %v807 = vunpack.c.l.b16 %v672
    %v808 = vunpack.c.l.b16 %v673
    %v809 = vunpack.c.l.b16 %v674
    %v810 = vunpack.c.l.b16 %v675
    %v811 = vunpack.c.l.b16 %v676
    %v812 = vunpack.c.l.b16 %v677
    %v813 = vunpack.c.l.b16 %v678
    %v814 = vunpack.c.l.b16 %v679
    %v815 = vunpack.c.l.b16 %v680
    %v816 = vunpack.c.l.b16 %v681
    %v817 = vunpack.c.l.b16 %v682
    %v818 = vunpack.c.l.b16 %v683
    %v819 = vunpack.c.l.b16 %v684
    %v820 = vunpack.c.l.b16 %v685
    %v821 = vunpack.c.l.b16 %v686
    %v822 = vunpack.c.l.b16 %v687
    %v823 = vunpack.c.l.b16 %v688
    %v824 = vunpack.c.l.b16 %v689
    %v825 = vunpack.c.l.b16 %v690
    %v826 = vunpack.c.l.b16 %v691
    %v827 = vunpack.c.l.b16 %v692
    %v828 = vunpack.c.l.b16 %v693
    %v829 = vunpack.c.l.b16 %v694
    %v830 = vunpack.c.l.b16 %v695
    %v831 = vunpack.c.l.b16 %v696
    %v832 = vunpack.c.l.b16 %v697
    %v833 = vunpack.c.l.b16 %v698
    %v834 = vunpack.c.l.b16 %v699
    %v835 = vunpack.c.l.b16 %v700
    %v836 = vunpack.c.l.b16 %v701
    %v837 = vunpack.c.l.b16 %v702
    %v838 = vunpack.c.l.b16 %v703
    %v839 = vunpack.c.l.b16 %v704
    %v840 = vunpack.c.l.b16 %v705
    %v841 = vunpack.c.l.b16 %v706
    %v842 = vunpack.c.l.b16 %v707
    %v843 = vunpack.c.l.b16 %v708
    %v844 = vunpack.c.l.b16 %v709
    %v845 = vunpack.c.l.b16 %v710
    %v846 = vunpack.c.l.b16 %v711
    %v847 = vunpack.c.l.b16 %v712
    %v848 = vunpack.c.l.b16 %v713
    %v849 = vunpack.c.l.b16 %v714
    %v850 = vunpack.c.l.b16 %v715
    %v851 = vunpack.c.l.b16 %v716
    %v852 = vunpack.c.l.b16 %v717
    %v853 = vunpack.c.l.b16 %v718
    %v854 = vunpack.c.l.b16 %v719
    %v855 = vunpack.c.l.b16 %v720
    %v856 = vunpack.c.l.b16 %v721
    %v857 = vunpack.c.l.b16 %v722
    %v858 = vunpack.c.l.b16 %v723
    %v859 = vunpack.c.l.b16 %v724
    %v860 = vunpack.c.l.b16 %v725
    %v861 = vunpack.c.l.b16 %v726
    %v862 = vunpack.c.l.b16 %v727
    %v863 = vunpack.c.l.b16 %v728
    %v864 = vunpack.c.l.b16 %v729
    %v865 = vunpack.c.l.b16 %v730
    %v866 = vunpack.c.l.b16 %v731
    %v867 = vpack.c.b16 %v804, %v803
    %v868 = vpack.c.b16 %v806, %v805
    %v869 = vpack.c.b16 %v808, %v807
    %v870 = vpack.c.b16 %v810, %v809
    %v871 = vpack.c.b16 %v812, %v811
    %v872 = vpack.c.b16 %v814, %v813
    %v873 = vpack.c.b16 %v816, %v815
    %v874 = vpack.c.b16 %v818, %v817
    %v875 = vpack.c.b16 %v820, %v819
    %v876 = vpack.c.b16 %v822, %v821
    %v877 = vpack.c.b16 %v824, %v823
    %v878 = vpack.c.b16 %v826, %v825
    %v879 = vpack.c.b16 %v828, %v827
    %v880 = vpack.c.b16 %v830, %v829
    %v881 = vpack.c.b16 %v832, %v831
    %v882 = vpack.c.b16 %v834, %v833
    %v883 = vpack.c.b16 %v836, %v835
    %v884 = vpack.c.b16 %v838, %v837
    %v885 = vpack.c.b16 %v840, %v839
    %v886 = vpack.c.b16 %v842, %v841
    %v887 = vpack.c.b16 %v844, %v843
    %v888 = vpack.c.b16 %v846, %v845
    %v889 = vpack.c.b16 %v848, %v847
    %v890 = vpack.c.b16 %v850, %v849
    %v891 = vpack.c.b16 %v852, %v851
    %v892 = vpack.c.b16 %v854, %v853
    %v893 = vpack.c.b16 %v856, %v855
    %v894 = vpack.c.b16 %v858, %v857
    %v895 = vpack.c.b16 %v860, %v859
    %v896 = vpack.c.b16 %v862, %v861
    %v897 = vpack.c.b16 %v864, %v863
    %v898 = vpack.c.b16 %v866, %v865
    %931 = vmatprep.subr.bf16.mxu0 0
    %932 = vmatpush1.bf16.msra.mxu0 %v874
    %933 = vmatprep.subr.bf16.mxu0 0
    %934 = vmatpush1.bf16.msra.mxu0 %v873
    %935 = vmatprep.subr.bf16.mxu0 0
    %936 = vmatpush1.bf16.msra.mxu0 %v872
    %937 = vmatprep.subr.bf16.mxu0 0
    %938 = vmatpush1.bf16.msra.mxu0 %v871
    %939 = vmatprep.subr.bf16.mxu0 0
    %940 = vmatpush1.bf16.msra.mxu0 %v870
    %941 = vmatprep.subr.bf16.mxu0 0
    %942 = vmatpush1.bf16.msra.mxu0 %v869
    %943 = vmatprep.subr.bf16.mxu0 0
    %944 = vmatpush1.bf16.msra.mxu0 %v868
    %945 = vmatprep.subr.bf16.mxu0 0
    %946 = vmatpush1.bf16.msra.mxu0 %v867
    %947 = vmatprep.subr.bf16.mxu0 0
    %948 = vmatpush2.bf16.msra.mxu0 %v882
    %949 = vmatprep.subr.bf16.mxu0 0
    %950 = vmatpush2.bf16.msra.mxu0 %v881
    %951 = vmatprep.subr.bf16.mxu0 0
    %952 = vmatpush2.bf16.msra.mxu0 %v880
    %953 = vmatprep.subr.bf16.mxu0 0
    %954 = vmatpush2.bf16.msra.mxu0 %v879
    %955 = vmatprep.subr.bf16.mxu0 0
    %956 = vmatpush2.bf16.msra.mxu0 %v878
    %957 = vmatprep.subr.bf16.mxu0 0
    %958 = vmatpush2.bf16.msra.mxu0 %v877
    %959 = vmatprep.subr.bf16.mxu0 0
    %960 = vmatpush2.bf16.msra.mxu0 %v876
    %961 = vmatprep.subr.bf16.mxu0 0
    %962 = vmatpush2.bf16.msra.mxu0 %v875
    %963 = vmatprep.mubr.bf16.mxu0 %v665
    %964 = vmatmul.mubr.bf16.gmra.mxu0 %v664
    %v965 = vpop.f32.mrf.mxu0
    %v966 = vadd.f32 %v737, %v965
    %v967 = vpop.f32.mrf.mxu0
    %v968 = vpop.f32.mrf.mxu0
    %v969 = vadd.f32 %v737, %v968
    %v970 = vpop.f32.mrf.mxu0
    %971 = vdwg.mxu0
    %972 = vmatprep.subr.bf16.mxu0 0
    %973 = vmatpush1.bf16.msra.mxu0 %v890
    %974 = vmatprep.subr.bf16.mxu0 0
    %975 = vmatpush1.bf16.msra.mxu0 %v889
    %976 = vmatprep.subr.bf16.mxu0 0
    %977 = vmatpush1.bf16.msra.mxu0 %v888
    %978 = vmatprep.subr.bf16.mxu0 0
    %979 = vmatpush1.bf16.msra.mxu0 %v887
    %980 = vmatprep.subr.bf16.mxu0 0
    %981 = vmatpush1.bf16.msra.mxu0 %v886
    %982 = vmatprep.subr.bf16.mxu0 0
    %983 = vmatpush1.bf16.msra.mxu0 %v885
    %984 = vmatprep.subr.bf16.mxu0 0
    %985 = vmatpush1.bf16.msra.mxu0 %v884
    %986 = vmatprep.subr.bf16.mxu0 0
    %987 = vmatpush1.bf16.msra.mxu0 %v883
    %988 = vmatprep.subr.bf16.mxu0 0
    %989 = vmatpush2.bf16.msra.mxu0 %v898
    %990 = vmatprep.subr.bf16.mxu0 0
    %991 = vmatpush2.bf16.msra.mxu0 %v897
    %992 = vmatprep.subr.bf16.mxu0 0
    %993 = vmatpush2.bf16.msra.mxu0 %v896
    %994 = vmatprep.subr.bf16.mxu0 0
    %995 = vmatpush2.bf16.msra.mxu0 %v895
    %996 = vmatprep.subr.bf16.mxu0 0
    %997 = vmatpush2.bf16.msra.mxu0 %v894
    %998 = vmatprep.subr.bf16.mxu0 0
    %999 = vmatpush2.bf16.msra.mxu0 %v893
    %1000 = vmatprep.subr.bf16.mxu0 0
    %1001 = vmatpush2.bf16.msra.mxu0 %v892
    %1002 = vmatprep.subr.bf16.mxu0 0
    %1003 = vmatpush2.bf16.msra.mxu0 %v891
    %1004 = vmatprep.mubr.bf16.mxu0 %v667
    %1005 = vmatmul.mubr.bf16.gmra.mxu0 %v666
    %v1006 = vpop.f32.mrf.mxu0
    %v1007 = vadd.f32 %v966, %v1006
    %v1008 = vpop.f32.mrf.mxu0
    %v1009 = vpop.f32.mrf.mxu0
    %v1010 = vadd.f32 %v969, %v1009
    %v1011 = vpop.f32.mrf.mxu0
    %1012 = vdwg.mxu0
    %v1013 = vmax.f32 %v1007, 0.0
    %v1014 = vmax.f32 %v1010, 0.0
    %1015 = vst [vmem:[%s7] sm:$0xff] %v1013
    %1016 = vst [vmem:[%s7 + $0x8] sm:$0xff] %v1014
    // Predicated region
    $region42: #{net_forward.1} parent=1 // pred_check
      _
    $region43: #{net_forward.1} parent=1 // pred_check_branch
      %1018 = sbr.rel (0) target = $region45
    $region44: #{net_forward.1} parent=1 // pred_region
      _
    $region45: #{net_forward.1} parent=1 // pred_fallthru
      _
    // Predicated region
    $region46: #{net_forward.1} parent=1 // pred_check
      _
    $region47: #{net_forward.1} parent=1 // pred_check_branch
      %1020 = sbr.rel (0) target = $region49
    $region48: #{net_forward.1} parent=1 // pred_region
      _
    $region49: #{net_forward.1} parent=1 // pred_fallthru
      _
    %1021 = vsyncpa [#allocation3], 1
    %1022 = vsyncpa [#allocation5], 1

</llo_original>
